<compile_context>
chip_gen: v7x
topology: tpu7x:2x2x1
jax: 0.10.0
libtpu: 0.0.40
codegen_flags: <defaults>
</compile_context>

<pallas_src>
import functools

import jax
import jax.numpy as jnp
from jax import lax
from jax.experimental import pallas as pl
from jax.experimental.pallas import tpu as pltpu


def _round_up(x, m):
    return (x + m - 1) // m * m


def bert_self_output_kernel(x_ref, res_ref, w_ref, b_ref, g_ref, beta_ref,
                            out_ref, *, eps):
    # --- dense: (tm, H) @ (H, H) on the MXU, bf16 inputs, f32 accumulation ---
    h = jnp.dot(x_ref[...], w_ref[...], preferred_element_type=jnp.float32)
    h = h + b_ref[...].astype(jnp.float32)

    # TODO(synk): Dropout is identity at inference; a training-mode dropout
    # would use pltpu.prng_seed / pltpu.prng_random_bits to build a keep-mask.

    # --- residual add + LayerNorm over the hidden (last) dim, f32 math ------
    y = h + res_ref[...].astype(jnp.float32)
    mean = jnp.mean(y, axis=-1, keepdims=True)
    centered = y - mean
    var = jnp.mean(centered * centered, axis=-1, keepdims=True)
    inv = lax.rsqrt(var + eps)
    normed = (centered * inv * g_ref[...].astype(jnp.float32)
              + beta_ref[...].astype(jnp.float32))
    out_ref[...] = normed.astype(out_ref.dtype)


def bert_self_output(hidden_states, input_tensor, params, *, eps=1e-12,
                     tm=512, matmul_dtype=jnp.bfloat16):
    """BertSelfOutput forward: LayerNorm(dense(hidden_states) + input_tensor).

    hidden_states, input_tensor: [B, S, H] -> output [B, S, H].
    params["dense_w"] is pre-transposed to [in, out].
    """
    B, S, H = hidden_states.shape
    M = B * S
    out_dtype = hidden_states.dtype

    # bf16 data path for the MXU / DMA; elementwise params stay f32.
    x2d = hidden_states.reshape(M, H).astype(matmul_dtype)
    r2d = input_tensor.reshape(M, H).astype(matmul_dtype)
    w = params["dense_w"].astype(matmul_dtype)          # [H, H] (in, out)
    b = params["dense_b"].reshape(1, H).astype(jnp.float32)
    gamma = params["ln_gamma"].reshape(1, H).astype(jnp.float32)
    beta = params["ln_beta"].reshape(1, H).astype(jnp.float32)

    in_bytes = jnp.dtype(matmul_dtype).itemsize
    out_bytes = jnp.dtype(out_dtype).itemsize

    # --- row-tile sizing ------------------------------------------------
    # Multiple of 8 (f32 sublanes), no bigger than the row count (rounded up).
    tm = max(8, min(tm, _round_up(M, 8)))
    # Keep >= 2 grid steps when possible so both v7x TensorCores get work.
    if M > 8:
        tm = min(tm, _round_up(pl.cdiv(M, 2), 8))
    # VMEM budget: stay under the most constrained default scoped limit
    # (v5e: 16 MiB).  Weight is single-buffered + resident; x/res/out tiles
    # are double-buffered by the pipeline.
    budget = 16 * 1024 * 1024
    resident = H * H * in_bytes + 3 * H * 4
    per_row = H * (2 * (2 * in_bytes) + 2 * out_bytes)
    avail = max(budget - resident, per_row * 8)
    tm = max(8, min(tm, (avail // per_row) // 8 * 8))
    tm = _round_up(tm, 8)

    grid = (pl.cdiv(M, tm),)   # ragged last block handled (cropped) by Pallas

    cost = pl.CostEstimate(
        flops=2 * M * H * H,
        transcendentals=0,
        bytes_accessed=M * H * (2 * in_bytes + out_bytes)
        + H * H * in_bytes + 3 * H * 4,
    )

    resident_mode = pl.Buffered(1)   # constant-index-map operands: 1 buffer
    out = pl.pallas_call(
        functools.partial(bert_self_output_kernel, eps=eps),
        out_shape=jax.ShapeDtypeStruct((M, H), out_dtype),
        grid_spec=pltpu.PrefetchScalarGridSpec(
            num_scalar_prefetch=0,
            grid=grid,
            in_specs=[
                pl.BlockSpec((tm, H), lambda i: (i, 0)),   # hidden rows
                pl.BlockSpec((tm, H), lambda i: (i, 0)),   # residual rows
                pl.BlockSpec((H, H), lambda i: (0, 0),
                             pipeline_mode=resident_mode),  # dense weight
                pl.BlockSpec((1, H), lambda i: (0, 0),
                             pipeline_mode=resident_mode),  # dense bias
                pl.BlockSpec((1, H), lambda i: (0, 0),
                             pipeline_mode=resident_mode),  # LN gamma
                pl.BlockSpec((1, H), lambda i: (0, 0),
                             pipeline_mode=resident_mode),  # LN beta
            ],
            out_specs=pl.BlockSpec((tm, H), lambda i: (i, 0)),
        ),
        compiler_params=pltpu.CompilerParams(
            dimension_semantics=("parallel",)),
        cost_estimate=cost,
    )(x2d, r2d, w, b, gamma, beta)

    return out.reshape(B, S, H)


def _reference(hidden_states, input_tensor, params, eps=1e-12,
               matmul_dtype=jnp.bfloat16):
    # Emulates the kernel's data path: bf16 inputs/weight, f32 accumulation
    # and f32 residual/LayerNorm math.
    x = hidden_states.astype(matmul_dtype).astype(jnp.float32)
    r = input_tensor.astype(matmul_dtype).astype(jnp.float32)
    w = params["dense_w"].astype(matmul_dtype).astype(jnp.float32)
    h = x @ w + params["dense_b"].astype(jnp.float32)
    y = h + r
    mean = jnp.mean(y, axis=-1, keepdims=True)
    var = jnp.mean((y - mean) ** 2, axis=-1, keepdims=True)
    out = ((y - mean) * lax.rsqrt(var + eps) * params["ln_gamma"]
           + params["ln_beta"])
    return out.astype(hidden_states.dtype)


if __name__ == "__main__":
    # Small BERT-ish config.  M = B*S = 16, so tm clamps to 8 and the grid has
    # 2 steps (exercises the multi-step pipeline without any wrapper padding).
    B, S, H = 2, 8, 128
    eps = 1e-12

    key = jax.random.PRNGKey(0)
    k_x, k_r, k_w, k_b, k_g, k_be = jax.random.split(key, 6)

    hidden_states = jax.random.normal(k_x, (B, S, H), dtype=jnp.float32)
    input_tensor = jax.random.normal(k_r, (B, S, H), dtype=jnp.float32)

    params = {
        # nn.Linear(H, H): weight stored pre-transposed as [in, out]
        "dense_w": jax.random.normal(k_w, (H, H), dtype=jnp.float32) * 0.02,
        "dense_b": jax.random.normal(k_b, (H,), dtype=jnp.float32) * 0.02,
        # LayerNorm params (non-trivial values to exercise the affine part)
        "ln_gamma": 1.0 + 0.1 * jax.random.normal(k_g, (H,), dtype=jnp.float32),
        "ln_beta": 0.1 * jax.random.normal(k_be, (H,), dtype=jnp.float32),
    }

    out = bert_self_output(hidden_states, input_tensor, params, eps=eps)
    out = jax.block_until_ready(out)

    ref = _reference(hidden_states, input_tensor, params, eps=eps)
    assert out.shape == (B, S, H)
    # bf16 matmul path -> slightly looser tolerance than a pure-f32 check.
    assert jnp.allclose(out, ref, atol=2e-2, rtol=2e-2), (
        float(jnp.max(jnp.abs(out - ref))))

    print("KERNEL_OK")
</pallas_src>

<mosaic_0001>
module attributes {stable_mosaic.version = 11 : i64} {
  func.func @bert_self_output_kernel(%arg0: i32, %arg1: memref<8x128xbf16, #tpu.memory_space<vmem>>, %arg2: memref<8x128xbf16, #tpu.memory_space<vmem>>, %arg3: memref<128x128xbf16, #tpu.memory_space<vmem>>, %arg4: memref<1x128xf32, #tpu.memory_space<vmem>>, %arg5: memref<1x128xf32, #tpu.memory_space<vmem>>, %arg6: memref<1x128xf32, #tpu.memory_space<vmem>>, %arg7: memref<8x128xf32, #tpu.memory_space<vmem>>) attributes {dimension_semantics = [#tpu.dimension_semantics<parallel>], iteration_bounds = array<i64: 2>, scalar_prefetch = 0 : i64, scratch_operands = 0 : i64, tpu.core_type = #tpu.core_type<tc>, window_params = [{transform_indices = @transform_0, window_bounds = array<i64: 8, 128>}, {transform_indices = @transform_1, window_bounds = array<i64: 8, 128>}, {pipeline_mode = #tpu.pipeline_mode<synchronous>, transform_indices = @transform_2, window_bounds = array<i64: 128, 128>}, {pipeline_mode = #tpu.pipeline_mode<synchronous>, transform_indices = @transform_3, window_bounds = array<i64: 1, 128>}, {pipeline_mode = #tpu.pipeline_mode<synchronous>, transform_indices = @transform_4, window_bounds = array<i64: 1, 128>}, {pipeline_mode = #tpu.pipeline_mode<synchronous>, transform_indices = @transform_5, window_bounds = array<i64: 1, 128>}, {transform_indices = @transform_6, window_bounds = array<i64: 8, 128>}]} {
    %c0 = arith.constant 0 : index
    %c0_0 = arith.constant 0 : index
    %0 = vector.load %arg1[%c0, %c0_0] : memref<8x128xbf16, #tpu.memory_space<vmem>>, vector<8x128xbf16>
    %c0_1 = arith.constant 0 : index
    %c0_2 = arith.constant 0 : index
    %1 = vector.load %arg3[%c0_1, %c0_2] : memref<128x128xbf16, #tpu.memory_space<vmem>>, vector<128x128xbf16>
    %cst = arith.constant dense<0.000000e+00> : vector<8x128xf32>
    %2 = tpu.matmul %0, %1, %cst {dimension_numbers = #tpu.dot_dimension_numbers<[1], [0], [0], [1], [0, 0, 1, 1], [], []>} : vector<8x128xbf16>, vector<128x128xbf16>, vector<8x128xf32> -> vector<8x128xf32>
    %c0_3 = arith.constant 0 : index
    %c0_4 = arith.constant 0 : index
    %3 = vector.load %arg4[%c0_3, %c0_4] : memref<1x128xf32, #tpu.memory_space<vmem>>, vector<1x128xf32>
    %4 = vector.broadcast %3 : vector<1x128xf32> to vector<8x128xf32>
    %5 = arith.addf %2, %4 : vector<8x128xf32>
    %c0_5 = arith.constant 0 : index
    %c0_6 = arith.constant 0 : index
    %6 = vector.load %arg2[%c0_5, %c0_6] : memref<8x128xbf16, #tpu.memory_space<vmem>>, vector<8x128xbf16>
    %7 = arith.extf %6 : vector<8x128xbf16> to vector<8x128xf32>
    %8 = arith.addf %5, %7 : vector<8x128xf32>
    %cst_7 = arith.constant dense<0.000000e+00> : vector<8xf32>
    %9 = vector.multi_reduction <add>, %8, %cst_7 [1] : vector<8x128xf32> to vector<8xf32>
    %10 = vector.shape_cast %9 : vector<8xf32> to vector<8x1xf32>
    %cst_8 = arith.constant 1.280000e+02 : f32
    %11 = vector.broadcast %cst_8 : f32 to vector<8x1xf32>
    %12 = arith.divf %10, %11 : vector<8x1xf32>
    %13 = vector.broadcast %12 : vector<8x1xf32> to vector<8x128xf32>
    %14 = arith.subf %8, %13 : vector<8x128xf32>
    %15 = arith.mulf %14, %14 : vector<8x128xf32>
    %cst_9 = arith.constant dense<0.000000e+00> : vector<8xf32>
    %16 = vector.multi_reduction <add>, %15, %cst_9 [1] : vector<8x128xf32> to vector<8xf32>
    %17 = vector.shape_cast %16 : vector<8xf32> to vector<8x1xf32>
    %cst_10 = arith.constant 1.280000e+02 : f32
    %18 = vector.broadcast %cst_10 : f32 to vector<8x1xf32>
    %19 = arith.divf %17, %18 : vector<8x1xf32>
    %cst_11 = arith.constant 9.99999996E-13 : f32
    %20 = vector.broadcast %cst_11 : f32 to vector<8x1xf32>
    %21 = arith.addf %19, %20 : vector<8x1xf32>
    %22 = math.rsqrt %21 : vector<8x1xf32>
    %23 = vector.broadcast %22 : vector<8x1xf32> to vector<8x128xf32>
    %24 = arith.mulf %14, %23 : vector<8x128xf32>
    %c0_12 = arith.constant 0 : index
    %c0_13 = arith.constant 0 : index
    %25 = vector.load %arg5[%c0_12, %c0_13] : memref<1x128xf32, #tpu.memory_space<vmem>>, vector<1x128xf32>
    %26 = vector.broadcast %25 : vector<1x128xf32> to vector<8x128xf32>
    %27 = arith.mulf %24, %26 : vector<8x128xf32>
    %c0_14 = arith.constant 0 : index
    %c0_15 = arith.constant 0 : index
    %28 = vector.load %arg6[%c0_14, %c0_15] : memref<1x128xf32, #tpu.memory_space<vmem>>, vector<1x128xf32>
    %29 = vector.broadcast %28 : vector<1x128xf32> to vector<8x128xf32>
    %30 = arith.addf %27, %29 : vector<8x128xf32>
    %c0_16 = arith.constant 0 : index
    %c0_17 = arith.constant 0 : index
    %31 = vector.load %arg7[%c0_16, %c0_17] : memref<8x128xf32, #tpu.memory_space<vmem>>, vector<8x128xf32>
    tpu.vector_store %arg7[%c0_16, %c0_17], %30 {strides = array<i32>} : memref<8x128xf32, #tpu.memory_space<vmem>>, vector<8x128xf32>,
    return
  }
  func.func @transform_0(%arg0: i32) -> (i32, i32) {
    %c0_i32 = arith.constant 0 : i32
    %c0_i32_0 = arith.constant 0 : i32
    return %arg0, %c0_i32 : i32, i32
  }
  func.func @transform_1(%arg0: i32) -> (i32, i32) {
    %c0_i32 = arith.constant 0 : i32
    %c0_i32_0 = arith.constant 0 : i32
    return %arg0, %c0_i32 : i32, i32
  }
  func.func @transform_2(%arg0: i32) -> (i32, i32) {
    %c0_i32 = arith.constant 0 : i32
    %c0_i32_0 = arith.constant 0 : i32
    %c0_i32_1 = arith.constant 0 : i32
    return %c0_i32, %c0_i32_0 : i32, i32
  }
  func.func @transform_3(%arg0: i32) -> (i32, i32) {
    %c0_i32 = arith.constant 0 : i32
    %c0_i32_0 = arith.constant 0 : i32
    %c0_i32_1 = arith.constant 0 : i32
    return %c0_i32, %c0_i32_0 : i32, i32
  }
  func.func @transform_4(%arg0: i32) -> (i32, i32) {
    %c0_i32 = arith.constant 0 : i32
    %c0_i32_0 = arith.constant 0 : i32
    %c0_i32_1 = arith.constant 0 : i32
    return %c0_i32, %c0_i32_0 : i32, i32
  }
  func.func @transform_5(%arg0: i32) -> (i32, i32) {
    %c0_i32 = arith.constant 0 : i32
    %c0_i32_0 = arith.constant 0 : i32
    %c0_i32_1 = arith.constant 0 : i32
    return %c0_i32, %c0_i32_0 : i32, i32
  }
  func.func @transform_6(%arg0: i32) -> (i32, i32) {
    %c0_i32 = arith.constant 0 : i32
    %c0_i32_0 = arith.constant 0 : i32
    return %arg0, %c0_i32 : i32, i32
  }
}

</mosaic_0001>

<llo_original>
// kernel: tpu_custom_call.1
$region0: #{tpu_custom_call.1}
  #allocation0 [shape = 'u32[]', space=smem, size = 0x4, offset = 0x4, fixed_abs, tag = 'smem constant byte address 0x4 - core index']
  #allocation1 [shape = 'u32[144,128]{1,0:T(1,128)}', space=vmem, size = 0x12000, scoped, tag = 'internal scratch']
  %s0 = inlined_call_operand.hbm [shape: bf16[16,128], index: 0, kind: input, shape index: {}]
  %s1 = inlined_call_operand.hbm [shape: bf16[16,128], index: 1, kind: input, shape index: {}]
  %s2 = inlined_call_operand.hbm [shape: bf16[128,128], index: 2, kind: input, shape index: {}]
  %s3 = inlined_call_operand.vmem [shape: f32[1,128], index: 3, kind: input, shape index: {}]
  %s4 = inlined_call_operand.vmem [shape: f32[1,128], index: 4, kind: input, shape index: {}]
  %s5 = inlined_call_operand.vmem [shape: f32[1,128], index: 5, kind: input, shape index: {}]
  %s6 = inlined_call_operand.hbm [shape: f32[16,128], index: 6, kind: output, shape index: {}]
  %s7 = sld [smem:[#allocation0]]
  $region69: #{tpu_custom_call.1} parent=0
    _
  %s9 = ssub.s32 1, %s7
  %s10 = scalar_select 0, %s9, %s7
  $region1: #{tpu_custom_call.1} parent=0
    #allocation2 [shape = 'u8[4096]{0}', space=vmem, size = 0x1000, scoped, tag = 'input window, operand 0']
    #allocation3 [shape = 's32[2]{0}', space=sflag, size = 0x8, scoped, tag = 'scoped memory for tpu_custom_call.1']
    #allocation4 [shape = 's32[2]{0}', space=sflag, size = 0x8, scoped, tag = 'scoped memory for tpu_custom_call.1']
    #allocation5 [shape = 'u8[4096]{0}', space=vmem, size = 0x1000, scoped, tag = 'input window, operand 1']
    #allocation6 [shape = 's32[2]{0}', space=sflag, size = 0x8, scoped, tag = 'scoped memory for tpu_custom_call.1']
    #allocation7 [shape = 'u8[32768]{0}', space=vmem, size = 0x8000, scoped, tag = 'input window, operand 2, single buffered']
    #allocation8 [shape = 'u8[8192]{0}', space=vmem, size = 0x2000, scoped, tag = 'output window, operand 0']
    %11 = vsyncpa [#allocation3], 0
    %s12 = scalar_lea.sflag [#allocation3], 1
    %13 = vsyncpa %s12, 0
    %14 = vsyncpa [#allocation6], 0
    %s15 = scalar_lea.sflag [#allocation6], 1
    %16 = vsyncpa %s15, 0
    %17 = vsyncpa [#allocation4], 0
    %s18 = scalar_lea.sflag [#allocation4], 1
    %19 = vsyncpa %s18, 0
    loop: start=0, step=1, limit=4
    $region2: #{tpu_custom_call.1} parent=1 // loop_pre_header
      _
    $region3: #{tpu_custom_call.1} parent=1 // loop_header
      %s21 = sphi 0, %s25
      %p22 = scmp.ge.s32.totalorder %s21, 4
      %s31 = sphi 0, %s33
      %s34 = sphi 0, %s31
      %s35 = sphi 0, %s34
      %s51 = sphi 0, %s35
      %s57 = sphi 0, %s59
      %s60 = sphi 0, %s57
      %s61 = sphi 0, %s60
      %s77 = sphi 0, %s61
      %s81 = sphi 0, %s81
      %s83 = sphi 0, %s81
      %s84 = sphi 0, %s83
      %s98 = sphi 0, %s84
      %s102 = sphi 0, %s102
      %s104 = sphi 0, %s102
      %s105 = sphi 0, %s104
      %s119 = sphi 0, %s105
      %s123 = sphi 0, %s123
      %s125 = sphi 0, %s123
      %s126 = sphi 0, %s125
      %s140 = sphi 0, %s126
      %s144 = sphi 0, %s144
      %s146 = sphi 0, %s144
      %s147 = sphi 0, %s146
      %s161 = sphi 0, %s147
      %s167 = sphi 0, %s169
      %s170 = sphi 0, %s167
      %s171 = sphi 0, %s170
      %s187 = sphi 0, %s171
    $region4: #{tpu_custom_call.1} parent=1 // loop_header_branch
      %24 = sbr.rel (%p22) target = $region8
    $region5: #{tpu_custom_call.1} parent=1 // loop_body
      %s26 = ssub.s32 %s21, 1
      %s27 = ssub.s32 %s21, 2
      %s28 = sadd.s32 %s21, 1
      %s29 = ssub.s32 %s21, %s28
      %p30 = scmp.eq.s32.totalorder %s29, 0
      %s32 = sadd.s32 %s31, 1
      %s33 = scalar_select %p30, %s31, %s32
      %p36 = pneg %p30
      %p37 = scmp.eq.s32.totalorder %s21, 1
      %p38 = por %p36, %p37
      %p39 = scmp.ne.s32.totalorder %s31, %s34
      %p40 = scmp.eq.s32.totalorder %s21, 0
      %p41 = por %p39, %p40
      %p42 = scmp.ne.s32.totalorder %s31, %s34
      %p43 = scmp.eq.s32.totalorder %s26, 1
      %p44 = por %p42, %p43
      %p45 = scmp.ne.s32.totalorder %s34, %s35
      %p46 = scmp.eq.s32.totalorder %s26, 0
      %p47 = por %p45, %p46
      %p48 = scmp.ne.s32.totalorder %s34, %s35
      %p49 = scmp.eq.s32.totalorder %s27, 1
      %p50 = por %p48, %p49
      %p52 = scmp.ne.s32.totalorder %s35, %s51
      %p53 = scmp.eq.s32.totalorder %s27, 0
      %p54 = por %p52, %p53
      %s55 = ssub.s32 %s21, %s28
      %p56 = scmp.eq.s32.totalorder %s55, 0
      %s58 = sadd.s32 %s57, 1
      %s59 = scalar_select %p56, %s57, %s58
      %p62 = pneg %p56
      %p63 = scmp.eq.s32.totalorder %s21, 1
      %p64 = por %p62, %p63
      %p65 = scmp.ne.s32.totalorder %s57, %s60
      %p66 = scmp.eq.s32.totalorder %s21, 0
      %p67 = por %p65, %p66
      %p68 = scmp.ne.s32.totalorder %s57, %s60
      %p69 = scmp.eq.s32.totalorder %s26, 1
      %p70 = por %p68, %p69
      %p71 = scmp.ne.s32.totalorder %s60, %s61
      %p72 = scmp.eq.s32.totalorder %s26, 0
      %p73 = por %p71, %p72
      %p74 = scmp.ne.s32.totalorder %s60, %s61
      %p75 = scmp.eq.s32.totalorder %s27, 1
      %p76 = por %p74, %p75
      %p78 = scmp.ne.s32.totalorder %s61, %s77
      %p79 = scmp.eq.s32.totalorder %s27, 0
      %p80 = por %p78, %p79
      %s82 = sadd.s32 %s81, 1
      %p85 = scmp.eq.s32.totalorder %s21, 1
      %p86 = scmp.ne.s32.totalorder %s81, %s83
      %p87 = scmp.eq.s32.totalorder %s21, 0
      %p88 = por %p86, %p87
      %p89 = scmp.ne.s32.totalorder %s81, %s83
      %p90 = scmp.eq.s32.totalorder %s26, 1
      %p91 = por %p89, %p90
      %p92 = scmp.ne.s32.totalorder %s83, %s84
      %p93 = scmp.eq.s32.totalorder %s26, 0
      %p94 = por %p92, %p93
      %p95 = scmp.ne.s32.totalorder %s83, %s84
      %p96 = scmp.eq.s32.totalorder %s27, 1
      %p97 = por %p95, %p96
      %p99 = scmp.ne.s32.totalorder %s84, %s98
      %p100 = scmp.eq.s32.totalorder %s27, 0
      %p101 = por %p99, %p100
      %s103 = sadd.s32 %s102, 1
      %p106 = scmp.eq.s32.totalorder %s21, 1
      %p107 = scmp.ne.s32.totalorder %s102, %s104
      %p108 = scmp.eq.s32.totalorder %s21, 0
      %p109 = por %p107, %p108
      %p110 = scmp.ne.s32.totalorder %s102, %s104
      %p111 = scmp.eq.s32.totalorder %s26, 1
      %p112 = por %p110, %p111
      %p113 = scmp.ne.s32.totalorder %s104, %s105
      %p114 = scmp.eq.s32.totalorder %s26, 0
      %p115 = por %p113, %p114
      %p116 = scmp.ne.s32.totalorder %s104, %s105
      %p117 = scmp.eq.s32.totalorder %s27, 1
      %p118 = por %p116, %p117
      %p120 = scmp.ne.s32.totalorder %s105, %s119
      %p121 = scmp.eq.s32.totalorder %s27, 0
      %p122 = por %p120, %p121
      %s124 = sadd.s32 %s123, 1
      %p127 = scmp.eq.s32.totalorder %s21, 1
      %p128 = scmp.ne.s32.totalorder %s123, %s125
      %p129 = scmp.eq.s32.totalorder %s21, 0
      %p130 = por %p128, %p129
      %p131 = scmp.ne.s32.totalorder %s123, %s125
      %p132 = scmp.eq.s32.totalorder %s26, 1
      %p133 = por %p131, %p132
      %p134 = scmp.ne.s32.totalorder %s125, %s126
      %p135 = scmp.eq.s32.totalorder %s26, 0
      %p136 = por %p134, %p135
      %p137 = scmp.ne.s32.totalorder %s125, %s126
      %p138 = scmp.eq.s32.totalorder %s27, 1
      %p139 = por %p137, %p138
      %p141 = scmp.ne.s32.totalorder %s126, %s140
      %p142 = scmp.eq.s32.totalorder %s27, 0
      %p143 = por %p141, %p142
      %s145 = sadd.s32 %s144, 1
      %p148 = scmp.eq.s32.totalorder %s21, 1
      %p149 = scmp.ne.s32.totalorder %s144, %s146
      %p150 = scmp.eq.s32.totalorder %s21, 0
      %p151 = por %p149, %p150
      %p152 = scmp.ne.s32.totalorder %s144, %s146
      %p153 = scmp.eq.s32.totalorder %s26, 1
      %p154 = por %p152, %p153
      %p155 = scmp.ne.s32.totalorder %s146, %s147
      %p156 = scmp.eq.s32.totalorder %s26, 0
      %p157 = por %p155, %p156
      %p158 = scmp.ne.s32.totalorder %s146, %s147
      %p159 = scmp.eq.s32.totalorder %s27, 1
      %p160 = por %p158, %p159
      %p162 = scmp.ne.s32.totalorder %s147, %s161
      %p163 = scmp.eq.s32.totalorder %s27, 0
      %p164 = por %p162, %p163
      %s165 = ssub.s32 %s21, %s28
      %p166 = scmp.eq.s32.totalorder %s165, 0
      %s168 = sadd.s32 %s167, 1
      %s169 = scalar_select %p166, %s167, %s168
      %p172 = pneg %p166
      %p173 = scmp.eq.s32.totalorder %s21, 1
      %p174 = por %p172, %p173
      %p175 = scmp.ne.s32.totalorder %s167, %s170
      %p176 = scmp.eq.s32.totalorder %s21, 0
      %p177 = por %p175, %p176
      %p178 = scmp.ne.s32.totalorder %s167, %s170
      %p179 = scmp.eq.s32.totalorder %s26, 1
      %p180 = por %p178, %p179
      %p181 = scmp.ne.s32.totalorder %s170, %s171
      %p182 = scmp.eq.s32.totalorder %s26, 0
      %p183 = por %p181, %p182
      %p184 = scmp.ne.s32.totalorder %s170, %s171
      %p185 = scmp.eq.s32.totalorder %s27, 1
      %p186 = por %p184, %p185
      %p188 = scmp.ne.s32.totalorder %s171, %s187
      %p189 = scmp.eq.s32.totalorder %s27, 0
      %p190 = por %p188, %p189
      %p191 = scmp.le.s32.totalorder 1, %s21
      %p192 = scmp.lt.s32.totalorder %s21, 3
      %p193 = pnand %p191, %p192
      %p194 = pneg %p193
      // Predicated region
      $region9: #{tpu_custom_call.1} parent=5 // pred_check
        _
      $region10: #{tpu_custom_call.1} parent=5 // pred_check_branch
        %196 = sbr.rel (%p193) target = $region12
      $region11: #{tpu_custom_call.1} parent=5 // pred_region
        %s197 = ssub.s32 %s21, 1
        // Predicated region
        $region13: #{tpu_custom_call.1} parent=11 // pred_check
          %p198 = pneg %p94
        $region14: #{tpu_custom_call.1} parent=11 // pred_check_branch
          %200 = sbr.rel (%p198) target = $region16
        $region15: #{tpu_custom_call.1} parent=11 // pred_region
          %s202 = ssub.s32 1024, 1024
          %203 = vsyncadd [#allocation6], %s202
          %s204 = sshll.u32 [#allocation7], 4
          %s205 = int_to_ptr.vmem [resolvable:$true] %s204
          %210 = dma.hbm_to_vmem [thread:$0]  %s2, 1024, %s205, [#allocation6], 64, 64, 4
        $region16: #{tpu_custom_call.1} parent=11 // pred_fallthru
          _
        // Predicated region
        $region17: #{tpu_custom_call.1} parent=11 // pred_check
          %p211 = pneg %p115
        $region18: #{tpu_custom_call.1} parent=11 // pred_check_branch
          %213 = sbr.rel (%p211) target = $region20
        $region19: #{tpu_custom_call.1} parent=11 // pred_region
          _
        $region20: #{tpu_custom_call.1} parent=11 // pred_fallthru
          _
        // Predicated region
        $region21: #{tpu_custom_call.1} parent=11 // pred_check
          %p214 = pneg %p136
        $region22: #{tpu_custom_call.1} parent=11 // pred_check_branch
          %216 = sbr.rel (%p214) target = $region24
        $region23: #{tpu_custom_call.1} parent=11 // pred_region
          _
        $region24: #{tpu_custom_call.1} parent=11 // pred_fallthru
          _
        // Predicated region
        $region25: #{tpu_custom_call.1} parent=11 // pred_check
          %p217 = pneg %p157
        $region26: #{tpu_custom_call.1} parent=11 // pred_check_branch
          %219 = sbr.rel (%p217) target = $region28
        $region27: #{tpu_custom_call.1} parent=11 // pred_region
          _
        $region28: #{tpu_custom_call.1} parent=11 // pred_fallthru
          _
      $region12: #{tpu_custom_call.1} parent=5 // pred_fallthru
        _
      %p220 = scmp.lt.s32.totalorder %s21, 2
      // Predicated region
      $region29: #{tpu_custom_call.1} parent=5 // pred_check
        %p221 = pneg %p220
      $region30: #{tpu_custom_call.1} parent=5 // pred_check_branch
        %223 = sbr.rel (%p221) target = $region32
      $region31: #{tpu_custom_call.1} parent=5 // pred_region
        // Predicated region
        $region33: #{tpu_custom_call.1} parent=31 // pred_check
          %p224 = pneg %p41
        $region34: #{tpu_custom_call.1} parent=31 // pred_check_branch
          %226 = sbr.rel (%p224) target = $region36
        $region35: #{tpu_custom_call.1} parent=31 // pred_region
          %s227 = sand.u32 %s31, 1
          %s228 = scalar_lea.sflag [#allocation3], %s227
          %s229 = sand.u32 %s31, 1
          %s230 = smul.addr %s229, 4
          %s231 = scalar_lea.vmem [#allocation2], %s230
          %s233 = ssub.s32 64, 64
          %234 = vsyncadd %s228, %s233
          %s235 = smul.addr %s21, 64
          %s236 = scalar_lea.hbm %s0, %s235
          %s238 = sshll.u32 %s231, 4
          %s239 = int_to_ptr.vmem [resolvable:$true] %s238
          %241 = dma.hbm_to_vmem [thread:$0]  %s236, 64, %s239, %s228
        $region36: #{tpu_custom_call.1} parent=31 // pred_fallthru
          _
        // Predicated region
        $region37: #{tpu_custom_call.1} parent=31 // pred_check
          %p242 = pneg %p67
        $region38: #{tpu_custom_call.1} parent=31 // pred_check_branch
          %244 = sbr.rel (%p242) target = $region40
        $region39: #{tpu_custom_call.1} parent=31 // pred_region
          %s245 = sand.u32 %s21, 1
          %s246 = scalar_lea.sflag [#allocation6], %s245
          %s247 = sand.u32 %s57, 1
          %s248 = smul.addr %s247, 4
          %s249 = scalar_lea.vmem [#allocation5], %s248
          %s251 = ssub.s32 64, 64
          %252 = vsyncadd %s246, %s251
          %s253 = smul.addr %s21, 64
          %s254 = scalar_lea.hbm %s1, %s253
          %s256 = sshll.u32 %s249, 4
          %s257 = int_to_ptr.vmem [resolvable:$true] %s256
          %259 = dma.hbm_to_vmem [thread:$0]  %s254, 64, %s257, %s246
        $region40: #{tpu_custom_call.1} parent=31 // pred_fallthru
          _
      $region32: #{tpu_custom_call.1} parent=5 // pred_fallthru
        _
      %p260 = scmp.le.s32.totalorder 1, %s21
      %p261 = scmp.lt.s32.totalorder %s21, 3
      %p262 = pnand %p260, %p261
      %p263 = pneg %p262
      // Predicated region
      $region41: #{tpu_custom_call.1} parent=5 // pred_check
        _
      $region42: #{tpu_custom_call.1} parent=5 // pred_check_branch
        %265 = sbr.rel (%p262) target = $region44
      $region43: #{tpu_custom_call.1} parent=5 // pred_region
        %s266 = ssub.s32 %s21, 1
        %s267 = sand.u32 %s34, 1
        %s268 = scalar_lea.sflag [#allocation3], %s267
        %s269 = sand.u32 %s34, 1
        %s270 = smul.addr %s269, 4
        %s271 = scalar_lea.vmem [#allocation2], %s270
        // Predicated region
        $region45: #{tpu_custom_call.1} parent=43 // pred_check
          %p272 = pneg %p47
        $region46: #{tpu_custom_call.1} parent=43 // pred_check_branch
          %274 = sbr.rel (%p272) target = $region48
        $region47: #{tpu_custom_call.1} parent=43 // pred_region
          %275 = dma.done %s268, 64
        $region48: #{tpu_custom_call.1} parent=43 // pred_fallthru
          _
        %s276 = sand.u32 %s26, 1
        %s277 = scalar_lea.sflag [#allocation6], %s276
        %s278 = sand.u32 %s60, 1
        %s279 = smul.addr %s278, 4
        %s280 = scalar_lea.vmem [#allocation5], %s279
        // Predicated region
        $region49: #{tpu_custom_call.1} parent=43 // pred_check
          %p281 = pneg %p73
        $region50: #{tpu_custom_call.1} parent=43 // pred_check_branch
          %283 = sbr.rel (%p281) target = $region52
        $region51: #{tpu_custom_call.1} parent=43 // pred_region
          %284 = dma.done %s277, 64
        $region52: #{tpu_custom_call.1} parent=43 // pred_fallthru
          _
        // Predicated region
        $region53: #{tpu_custom_call.1} parent=43 // pred_check
          %p285 = pneg %p94
        $region54: #{tpu_custom_call.1} parent=43 // pred_check_branch
          %287 = sbr.rel (%p285) target = $region56
        $region55: #{tpu_custom_call.1} parent=43 // pred_region
          %288 = dma.done [#allocation6], 1024
        $region56: #{tpu_custom_call.1} parent=43 // pred_fallthru
          _
        %s289 = sand.u32 %s34, 1
        %s290 = scalar_lea.sflag [#allocation3], %s289
        %s291 = sand.u32 %s34, 1
        %s292 = smul.addr %s291, 4
        %s293 = scalar_lea.vmem [#allocation2], %s292
        %p294 = pneg %p47
        %p295 = pneg %p44
        %s296 = sand.u32 %s26, 1
        %s297 = scalar_lea.sflag [#allocation6], %s296
        %s298 = sand.u32 %s60, 1
        %s299 = smul.addr %s298, 4
        %s300 = scalar_lea.vmem [#allocation5], %s299
        %p301 = pneg %p73
        %p302 = pneg %p70
        %p303 = pneg %p94
        %p304 = pneg %p91
        %p305 = pneg %p115
        %p306 = pneg %p112
        %p307 = pneg %p136
        %p308 = pneg %p133
        %p309 = pneg %p157
        %p310 = pneg %p154
        %p311 = pneg %p183
        %p312 = pneg %p180
        %s313 = sand.u32 %s170, 1
        %s314 = scalar_lea.sflag [#allocation4], %s313
        %s315 = sand.u32 %s170, 1
        %s316 = smul.addr %s315, 8
        %s317 = scalar_lea.vmem [#allocation8], %s316
        %v319 = vld [vmem:[%s271] sm:$0xf]
        %v320 = vld [vmem:[#allocation7] sm:$0xf]
        %v321 = vld [vmem:[#allocation7 + $0x4] sm:$0xf]
        %v322 = vld [vmem:[#allocation7 + $0x8] sm:$0xf]
        %v323 = vld [vmem:[#allocation7 + $0xc] sm:$0xf]
        %v324 = vld [vmem:[#allocation7 + $0x10] sm:$0xf]
        %v325 = vld [vmem:[#allocation7 + $0x14] sm:$0xf]
        %v326 = vld [vmem:[#allocation7 + $0x18] sm:$0xf]
        %v327 = vld [vmem:[#allocation7 + $0x1c] sm:$0xf]
        %v328 = vld [vmem:[#allocation7 + $0x20] sm:$0xf]
        %v329 = vld [vmem:[#allocation7 + $0x24] sm:$0xf]
        %v330 = vld [vmem:[#allocation7 + $0x28] sm:$0xf]
        %v331 = vld [vmem:[#allocation7 + $0x2c] sm:$0xf]
        %v332 = vld [vmem:[#allocation7 + $0x30] sm:$0xf]
        %v333 = vld [vmem:[#allocation7 + $0x34] sm:$0xf]
        %v334 = vld [vmem:[#allocation7 + $0x38] sm:$0xf]
        %v335 = vld [vmem:[#allocation7 + $0x3c] sm:$0xf]
        %v336 = vld [vmem:[%s3] sm:$0x1]
        %v338 = vlaneseq
        %v339 = vshrl.u32 %v338, 7
        %v340 = vsub.s32 0, %v339
        %v341 = vrot.slane %v336, %v340
        %v359 = vunpack.c.l.b16 %v320
        %v360 = vunpack.c.l.b16 %v321
        %v361 = vunpack.c.l.b16 %v322
        %v362 = vunpack.c.l.b16 %v323
        %v363 = vunpack.c.l.b16 %v324
        %v364 = vunpack.c.l.b16 %v325
        %v365 = vunpack.c.l.b16 %v326
        %v366 = vunpack.c.l.b16 %v327
        %v367 = vunpack.c.l.b16 %v328
        %v368 = vunpack.c.l.b16 %v329
        %v369 = vunpack.c.l.b16 %v330
        %v370 = vunpack.c.l.b16 %v331
        %v371 = vunpack.c.l.b16 %v332
        %v372 = vunpack.c.l.b16 %v333
        %v373 = vunpack.c.l.b16 %v334
        %v374 = vunpack.c.l.b16 %v335
        %v375 = vpack.c.b16 %v360, %v359
        %v376 = vpack.c.b16 %v362, %v361
        %v377 = vpack.c.b16 %v364, %v363
        %v378 = vpack.c.b16 %v366, %v365
        %v379 = vpack.c.b16 %v368, %v367
        %v380 = vpack.c.b16 %v370, %v369
        %v381 = vpack.c.b16 %v372, %v371
        %v382 = vpack.c.b16 %v374, %v373
        %391 = vmatprep.subr.bf16.mxu0 0
        %392 = vmatpush1.bf16.msra.mxu0 %v375
        %393 = vmatprep.subr.bf16.mxu0 0
        %394 = vmatpush1.bf16.msra.mxu0 %v376
        %395 = vmatprep.subr.bf16.mxu0 0
        %396 = vmatpush1.bf16.msra.mxu0 %v377
        %397 = vmatprep.subr.bf16.mxu0 0
        %398 = vmatpush1.bf16.msra.mxu0 %v378
        %399 = vmatprep.subr.bf16.mxu0 0
        %400 = vmatpush1.bf16.msra.mxu0 %v379
        %401 = vmatprep.subr.bf16.mxu0 0
        %402 = vmatpush1.bf16.msra.mxu0 %v380
        %403 = vmatprep.subr.bf16.mxu0 0
        %404 = vmatpush1.bf16.msra.mxu0 %v381
        %405 = vmatprep.subr.bf16.mxu0 0
        %406 = vmatpush1.bf16.msra.mxu0 %v382
        %407 = vmatprep.subr.bf16.mxu0 0
        %408 = vmatpush1.bf16.msra.mxu0 0
        %409 = vmatprep.subr.bf16.mxu0 0
        %410 = vmatpush1.bf16.msra.mxu0 0
        %411 = vmatprep.subr.bf16.mxu0 0
        %412 = vmatpush1.bf16.msra.mxu0 0
        %413 = vmatprep.subr.bf16.mxu0 0
        %414 = vmatpush1.bf16.msra.mxu0 0
        %415 = vmatprep.subr.bf16.mxu0 0
        %416 = vmatpush1.bf16.msra.mxu0 0
        %417 = vmatprep.subr.bf16.mxu0 0
        %418 = vmatpush1.bf16.msra.mxu0 0
        %419 = vmatprep.subr.bf16.mxu0 0
        %420 = vmatpush1.bf16.msra.mxu0 0
        %421 = vmatprep.subr.bf16.mxu0 0
        %422 = vmatpush1.bf16.msra.mxu0 0
        %423 = vmatprep.mubr.bf16.mxu0 0
        %424 = vmatmul.mubr.bf16.gmra.mrb[0].mxu0 %v319
        %v425 = vpop.f32.mrb[0].mxu0
        %v426 = vadd.f32 %v341, %v425
        %v427 = vpop.f32.mrb[0].mxu0
        %v428 = vpop.f32.mrb[0].mxu0
        %v429 = vpop.f32.mrb[0].mxu0
        %430 = vdwg.mxu0
        %v431 = vld [vmem:[%s280] sm:$0xf]
        %v432 = vunpack.c.l.bf16 %v431
        %v433 = vadd.f32 %v426, %v432
        %434 = vadd.xlane.f32.xlu0 %v433
        %v435 = vpop.xlane.xlu0 %434
        %v436 = vrcp.pop 128.0
        %v437 = vmul.f32 %v435, %v436
        %v438 = vsub.f32 %v433, %v437
        %v439 = vmul.f32 %v438, %v438
        %440 = vadd.xlane.f32.xlu0 %v439
        %v441 = vpop.xlane.xlu0 %440
        %v442 = vmul.f32 %v441, %v436
        %v443 = vadd.f32 %v442, 1e-12
        %v444 = vrsqrt.pop %v443
        %v445 = vmul.f32 %v438, %v444
        %v446 = vld [vmem:[%s4] sm:$0x1]
        %v448 = vlaneseq
        %v449 = vshrl.u32 %v448, 7
        %v450 = vsub.s32 0, %v449
        %v451 = vrot.slane %v446, %v450
        %v453 = vmul.f32 %v445, %v451
        %v454 = vld [vmem:[%s5] sm:$0x1]
        %v456 = vlaneseq
        %v457 = vshrl.u32 %v456, 7
        %v458 = vsub.s32 0, %v457
        %v459 = vrot.slane %v454, %v458
        %v461 = vadd.f32 %v453, %v459
        %462 = vst [vmem:[%s317] sm:$0xff] %v461
        %s463 = sand.u32 %s170, 1
        %s464 = scalar_lea.sflag [#allocation4], %s463
        %s465 = sand.u32 %s170, 1
        %s466 = smul.addr %s465, 8
        %s467 = scalar_lea.vmem [#allocation8], %s466
        // Predicated region
        $region57: #{tpu_custom_call.1} parent=43 // pred_check
          %p468 = pneg %p180
        $region58: #{tpu_custom_call.1} parent=43 // pred_check_branch
          %470 = sbr.rel (%p468) target = $region60
        $region59: #{tpu_custom_call.1} parent=43 // pred_region
          %s472 = ssub.s32 128, 128
          %473 = vsyncadd %s464, %s472
          %s474 = smul.addr %s26, 128
          %s475 = scalar_lea.hbm %s6, %s474
          %s477 = sshll.u32 %s467, 4
          %s478 = int_to_ptr.vmem [resolvable:$true] %s477
          %480 = dma.vmem_to_hbm [thread:$0]  %s478, 128, %s475, %s464
        $region60: #{tpu_custom_call.1} parent=43 // pred_fallthru
          _
      $region44: #{tpu_custom_call.1} parent=5 // pred_fallthru
        _
      %p481 = scmp.le.s32.totalorder 2, %s21
      // Predicated region
      $region61: #{tpu_custom_call.1} parent=5 // pred_check
        %p482 = pneg %p481
      $region62: #{tpu_custom_call.1} parent=5 // pred_check_branch
        %484 = sbr.rel (%p482) target = $region64
      $region63: #{tpu_custom_call.1} parent=5 // pred_region
        %s485 = ssub.s32 %s21, 2
        // Predicated region
        $region65: #{tpu_custom_call.1} parent=63 // pred_check
          %p486 = pneg %p186
        $region66: #{tpu_custom_call.1} parent=63 // pred_check_branch
          %488 = sbr.rel (%p486) target = $region68
        $region67: #{tpu_custom_call.1} parent=63 // pred_region
          %s489 = sand.u32 %s171, 1
          %s490 = scalar_lea.sflag [#allocation4], %s489
          %s491 = sand.u32 %s171, 1
          %s492 = smul.addr %s491, 8
          %s493 = scalar_lea.vmem [#allocation8], %s492
          %494 = dma.done %s490, 128
        $region68: #{tpu_custom_call.1} parent=63 // pred_fallthru
          _
      $region64: #{tpu_custom_call.1} parent=5 // pred_fallthru
        _
    $region6: #{tpu_custom_call.1} parent=1 // loop_footer
      %s25 = sadd.s32 1, %s21
    $region7: #{tpu_custom_call.1} parent=1 // loop_footer_branch
      %20 = sbr.rel target = $region3
    $region8: #{tpu_custom_call.1} parent=1 // loop_exit
      _
    %495 = vsyncpa [#allocation3], 1
    %s496 = scalar_lea.sflag [#allocation3], 1
    %497 = vsyncpa %s496, 1
    %498 = vsyncpa [#allocation6], 1
    %s499 = scalar_lea.sflag [#allocation6], 1
    %500 = vsyncpa %s499, 1
    %501 = vsyncpa [#allocation4], 1
    %s502 = scalar_lea.sflag [#allocation4], 1
    %503 = vsyncpa %s502, 1

</llo_original>
